<compile_context>
chip_gen: v7x
topology: tpu7x:2x2x1
jax: 0.10.0
libtpu: 0.0.40
codegen_flags: <defaults>
</compile_context>

<pallas_src>
import jax
import jax.numpy as jnp
from jax.experimental import pallas as pl
from jax.experimental.pallas import tpu as pltpu


def rnn_seq_kernel(
    x_ref,      # (1, Bp, D_in)  — current timestep's input block
    h0_ref,     # (Bp, H)        — initial hidden (read only at t == 0)
    wx_ref,     # (D_in, H+O)    — [w_i2h_x | w_i2o_x]
    wh_ref,     # (H,    H+O)    — [w_i2h_h | w_i2o_h]
    bxh_ref,    # (1,    H+O)    — [b_i2h   | b_i2o]
    wo_ref,     # (H+O,  O)      — o2o weight (transposed)
    bo_ref,     # (1,    O)
    out_ref,    # (1, Bp, O)
    hid_ref,    # (Bp, H)        — final hidden
    h_scratch,  # VMEM (Bp, H)   — hidden carried across timesteps
):
    t = pl.program_id(0)
    H = h_scratch.shape[-1]

    @pl.when(t == 0)
    def _():
        h_scratch[...] = h0_ref[...]

    x = x_ref[0]              # (Bp, D_in)
    h = h_scratch[...]        # (Bp, H)

    # cat(hidden, output) in one shot:
    #   ho[:, :H]  == i2h(cat(x, h))
    #   ho[:, H:]  == i2o(cat(x, h))
    ho = (
        jnp.dot(x, wx_ref[...], preferred_element_type=jnp.float32)
        + jnp.dot(h, wh_ref[...], preferred_element_type=jnp.float32)
        + bxh_ref[...]
    )
    hidden = ho[:, :H]

    # output = o2o(cat(hidden, output))
    out = jnp.dot(ho, wo_ref[...], preferred_element_type=jnp.float32) + bo_ref[...]

    # dropout(p=0.1): identity in eval mode.
    # TODO(synk): training-mode dropout (mask * 1/(1-p)) via pltpu.prng_* if needed.

    # softmax over dim=1 (numerically stable); reciprocal goes to the EUP slot.
    out = out - jnp.max(out, axis=-1, keepdims=True)
    e = jnp.exp(out)
    out = e * pl.reciprocal(jnp.sum(e, axis=-1, keepdims=True), approx=True)

    out_ref[0] = out.astype(out_ref.dtype)
    h_scratch[...] = hidden

    @pl.when(t == pl.num_programs(0) - 1)
    def _():
        hid_ref[...] = hidden.astype(hid_ref.dtype)


def prepare_params(params, d_in, hidden_size, output_size):
    """One-time layout transform of PyTorch-style (out,in) weights into the
    packed, pre-transposed kernel layout. Do NOT call per forward step."""
    w_i2h, b_i2h, w_i2o, b_i2o, w_o2o, b_o2o = params
    H, O = hidden_size, output_size

    w_i2h_t = w_i2h.T            # (D_in + H, H)
    w_i2o_t = w_i2o.T            # (D_in + H, O)
    w_o2o_t = w_o2o.T            # (H + O, O)

    # Split at the cat(x, h) boundary, then pack along the output dim so one
    # matmul pair produces cat(hidden, output) directly.
    w_x = jnp.concatenate([w_i2h_t[:d_in], w_i2o_t[:d_in]], axis=1)   # (D_in, H+O)
    w_h = jnp.concatenate([w_i2h_t[d_in:], w_i2o_t[d_in:]], axis=1)   # (H,    H+O)
    b_xh = jnp.concatenate([b_i2h, b_i2o]).reshape(1, H + O)          # (1,    H+O)
    b_o = b_o2o.reshape(1, O)                                         # (1,    O)

    return (
        w_x.astype(jnp.float32),
        w_h.astype(jnp.float32),
        b_xh.astype(jnp.float32),
        w_o2o_t.astype(jnp.float32),
        b_o.astype(jnp.float32),
    )


def rnn_sequence_forward(xs, h0, prepared):
    """Run the RNN over a whole sequence in one pallas_call.

    xs: (T, B, D_in), h0: (B, H).
    Returns (outputs (T, B, O), final_hidden (B, H))."""
    w_x, w_h, b_xh, w_o, b_o = prepared
    T, B, D_in = xs.shape
    H = h0.shape[-1]
    HO = w_x.shape[-1]
    O = w_o.shape[-1]

    # Pad the batch to a multiple of 8 sublanes (lane/sublane-dense stores).
    Bp = ((B + 7) // 8) * 8
    if Bp != B:
        xs_p = jnp.zeros((T, Bp, D_in), jnp.float32).at[:, :B].set(xs)
        h0_p = jnp.zeros((Bp, H), jnp.float32).at[:B].set(h0)
    else:
        xs_p = xs.astype(jnp.float32)
        h0_p = h0.astype(jnp.float32)

    const2 = lambda shape: pl.BlockSpec(shape, lambda t: (0, 0))

    outs, hid = pl.pallas_call(
        rnn_seq_kernel,
        out_shape=(
            jax.ShapeDtypeStruct((T, Bp, O), jnp.float32),
            jax.ShapeDtypeStruct((Bp, H), jnp.float32),
        ),
        grid=(T,),
        in_specs=[
            pl.BlockSpec((1, Bp, D_in), lambda t: (t, 0, 0)),   # x_t
            const2((Bp, H)),                                    # h0
            const2((D_in, HO)),                                 # W_x   (resident)
            const2((H, HO)),                                    # W_h   (resident)
            const2((1, HO)),                                    # b_xh  (resident)
            const2((HO, O)),                                    # W_o   (resident)
            const2((1, O)),                                     # b_o   (resident)
        ],
        out_specs=(
            pl.BlockSpec((1, Bp, O), lambda t: (t, 0, 0)),      # per-step outputs
            const2((Bp, H)),                                    # final hidden
        ),
        scratch_shapes=[pltpu.VMEM((Bp, H), jnp.float32)],
        compiler_params=pltpu.CompilerParams(
            dimension_semantics=("arbitrary",),   # time axis carries state
        ),
    )(xs_p, h0_p, w_x, w_h, b_xh, w_o, b_o)

    return outs[:, :B], hid[:B]


def rnn_forward(x, h, prepared):
    """Single-step forward matching the PyTorch module: returns (output, hidden)."""
    outs, hid = rnn_sequence_forward(x[None], h, prepared)
    return outs[0], hid


def init_params(key, input_size, hidden_size, output_size):
    """Deterministic init mirroring nn.Linear's U(-1/sqrt(fan_in), 1/sqrt(fan_in))."""
    ks = jax.random.split(key, 6)

    def linear(kw, kb, fan_in, fan_out):
        bound = 1.0 / jnp.sqrt(fan_in)
        w = jax.random.uniform(kw, (fan_out, fan_in), jnp.float32, -bound, bound)
        b = jax.random.uniform(kb, (fan_out,), jnp.float32, -bound, bound)
        return w, b

    w_i2h, b_i2h = linear(ks[0], ks[1], input_size, hidden_size)
    w_i2o, b_i2o = linear(ks[2], ks[3], input_size, output_size)
    w_o2o, b_o2o = linear(ks[4], ks[5], hidden_size + output_size, output_size)
    return (w_i2h, b_i2h, w_i2o, b_i2o, w_o2o, b_o2o)


if __name__ == "__main__":
    # Small shapes: seq T=8, batch B=2, data dim D_in=16, hidden=32, output=16.
    # As in the PyTorch module's forward, the Linear in_features of i2h/i2o
    # must equal D_in + hidden (the concatenated width), i.e. input_size = 48.
    T, B, D_in, H, O = 8, 2, 16, 32, 16
    input_size = D_in + H

    key = jax.random.PRNGKey(0)
    k_x, k_h, k_p = jax.random.split(key, 3)

    xs = jax.random.normal(k_x, (T, B, D_in), jnp.float32)
    h0 = jax.random.normal(k_h, (B, H), jnp.float32)
    params = init_params(k_p, input_size, H, O)
    prepared = prepare_params(params, D_in, H, O)   # one-time layout prep

    outs, h_last = rnn_sequence_forward(xs, h0, prepared)
    jax.block_until_ready((outs, h_last))

    # ---- pure-JAX reference (exact module semantics, step by step) ----
    w_i2h, b_i2h, w_i2o, b_i2o, w_o2o, b_o2o = params
    h_ref = h0
    ref_outs = []
    for t in range(T):
        ic = jnp.concatenate([xs[t], h_ref], axis=1)
        h_ref = ic @ w_i2h.T + b_i2h
        o_ref = ic @ w_i2o.T + b_i2o
        oc = jnp.concatenate([h_ref, o_ref], axis=1)
        o_ref = oc @ w_o2o.T + b_o2o
        o_ref = jax.nn.softmax(o_ref, axis=1)   # eval-mode dropout == identity
        ref_outs.append(o_ref)
    ref_outs = jnp.stack(ref_outs)

    # approx reciprocal in the softmax -> ~1e-3 tolerance on the outputs
    assert jnp.allclose(outs, ref_outs, atol=1e-3, rtol=1e-3), "sequence output mismatch"
    assert jnp.allclose(h_last, h_ref, atol=1e-4, rtol=1e-4), "final hidden mismatch"

    # single-step call matches the module's forward(input, hidden) exactly
    out1, hid1 = rnn_forward(xs[0], h0, prepared)
    jax.block_until_ready((out1, hid1))
    assert jnp.allclose(out1, ref_outs[0], atol=1e-3, rtol=1e-3), "step output mismatch"

    print("KERNEL_OK")
</pallas_src>

<mosaic_0001>
module attributes {stable_mosaic.version = 11 : i64} {
  func.func @rnn_seq_kernel(%arg0: i32, %arg1: memref<1x8x16xf32, #tpu.memory_space<vmem>>, %arg2: memref<8x32xf32, #tpu.memory_space<vmem>>, %arg3: memref<16x48xf32, #tpu.memory_space<vmem>>, %arg4: memref<32x48xf32, #tpu.memory_space<vmem>>, %arg5: memref<1x48xf32, #tpu.memory_space<vmem>>, %arg6: memref<48x16xf32, #tpu.memory_space<vmem>>, %arg7: memref<1x16xf32, #tpu.memory_space<vmem>>, %arg8: memref<1x8x16xf32, #tpu.memory_space<vmem>>, %arg9: memref<8x32xf32, #tpu.memory_space<vmem>>, %arg10: memref<8x32xf32, #tpu.memory_space<vmem>>) attributes {dimension_semantics = [#tpu.dimension_semantics<arbitrary>], iteration_bounds = array<i64: 8>, scalar_prefetch = 0 : i64, scratch_operands = 1 : i64, tpu.core_type = #tpu.core_type<tc>, window_params = [{transform_indices = @transform_0, window_bounds = array<i64: 1, 8, 16>}, {pipeline_mode = #tpu.pipeline_mode<synchronous>, transform_indices = @transform_1, window_bounds = array<i64: 8, 32>}, {pipeline_mode = #tpu.pipeline_mode<synchronous>, transform_indices = @transform_2, window_bounds = array<i64: 16, 48>}, {pipeline_mode = #tpu.pipeline_mode<synchronous>, transform_indices = @transform_3, window_bounds = array<i64: 32, 48>}, {pipeline_mode = #tpu.pipeline_mode<synchronous>, transform_indices = @transform_4, window_bounds = array<i64: 1, 48>}, {pipeline_mode = #tpu.pipeline_mode<synchronous>, transform_indices = @transform_5, window_bounds = array<i64: 48, 16>}, {pipeline_mode = #tpu.pipeline_mode<synchronous>, transform_indices = @transform_6, window_bounds = array<i64: 1, 16>}, {transform_indices = @transform_7, window_bounds = array<i64: 1, 8, 16>}, {pipeline_mode = #tpu.pipeline_mode<synchronous>, transform_indices = @transform_8, window_bounds = array<i64: 8, 32>}]} {
    %c0_i32 = arith.constant 0 : i32
    %0 = arith.cmpi eq, %arg0, %c0_i32 : i32
    %1 = arith.extui %0 : i1 to i32
    %c0_i32_0 = arith.constant 0 : i32
    %2 = arith.cmpi ne, %1, %c0_i32_0 : i32
    scf.if %2 {
      %c0_25 = arith.constant 0 : index
      %c0_26 = arith.constant 0 : index
      %37 = vector.load %arg2[%c0_25, %c0_26] : memref<8x32xf32, #tpu.memory_space<vmem>>, vector<8x32xf32>
      %c0_27 = arith.constant 0 : index
      %c0_28 = arith.constant 0 : index
      %38 = vector.load %arg10[%c0_27, %c0_28] : memref<8x32xf32, #tpu.memory_space<vmem>>, vector<8x32xf32>
      tpu.vector_store %arg10[%c0_27, %c0_28], %37 {strides = array<i32>} : memref<8x32xf32, #tpu.memory_space<vmem>>, vector<8x32xf32>,
    } else {
    }
    %c0 = arith.constant 0 : index
    %c0_1 = arith.constant 0 : index
    %c0_2 = arith.constant 0 : index
    %3 = vector.load %arg1[%c0, %c0_1, %c0_2] : memref<1x8x16xf32, #tpu.memory_space<vmem>>, vector<1x8x16xf32>
    %4 = vector.shape_cast %3 : vector<1x8x16xf32> to vector<8x16xf32>
    %c0_3 = arith.constant 0 : index
    %c0_4 = arith.constant 0 : index
    %5 = vector.load %arg10[%c0_3, %c0_4] : memref<8x32xf32, #tpu.memory_space<vmem>>, vector<8x32xf32>
    %c0_5 = arith.constant 0 : index
    %c0_6 = arith.constant 0 : index
    %6 = vector.load %arg3[%c0_5, %c0_6] : memref<16x48xf32, #tpu.memory_space<vmem>>, vector<16x48xf32>
    %cst = arith.constant dense<0.000000e+00> : vector<8x48xf32>
    %7 = tpu.matmul %4, %6, %cst {dimension_numbers = #tpu.dot_dimension_numbers<[1], [0], [0], [1], [0, 0, 1, 1], [], []>} : vector<8x16xf32>, vector<16x48xf32>, vector<8x48xf32> -> vector<8x48xf32>
    %c0_7 = arith.constant 0 : index
    %c0_8 = arith.constant 0 : index
    %8 = vector.load %arg4[%c0_7, %c0_8] : memref<32x48xf32, #tpu.memory_space<vmem>>, vector<32x48xf32>
    %cst_9 = arith.constant dense<0.000000e+00> : vector<8x48xf32>
    %9 = tpu.matmul %5, %8, %cst_9 {dimension_numbers = #tpu.dot_dimension_numbers<[1], [0], [0], [1], [0, 0, 1, 1], [], []>} : vector<8x32xf32>, vector<32x48xf32>, vector<8x48xf32> -> vector<8x48xf32>
    %10 = arith.addf %7, %9 : vector<8x48xf32>
    %c0_10 = arith.constant 0 : index
    %c0_11 = arith.constant 0 : index
    %11 = vector.load %arg5[%c0_10, %c0_11] : memref<1x48xf32, #tpu.memory_space<vmem>>, vector<1x48xf32>
    %12 = vector.broadcast %11 : vector<1x48xf32> to vector<8x48xf32>
    %13 = arith.addf %10, %12 : vector<8x48xf32>
    %14 = vector.extract_strided_slice %13 {offsets = [0, 0], sizes = [8, 32], strides = [1, 1]} : vector<8x48xf32> to vector<8x32xf32>
    %c0_12 = arith.constant 0 : index
    %c0_13 = arith.constant 0 : index
    %15 = vector.load %arg6[%c0_12, %c0_13] : memref<48x16xf32, #tpu.memory_space<vmem>>, vector<48x16xf32>
    %cst_14 = arith.constant dense<0.000000e+00> : vector<8x16xf32>
    %16 = tpu.matmul %13, %15, %cst_14 {dimension_numbers = #tpu.dot_dimension_numbers<[1], [0], [0], [1], [0, 0, 1, 1], [], []>} : vector<8x48xf32>, vector<48x16xf32>, vector<8x16xf32> -> vector<8x16xf32>
    %c0_15 = arith.constant 0 : index
    %c0_16 = arith.constant 0 : index
    %17 = vector.load %arg7[%c0_15, %c0_16] : memref<1x16xf32, #tpu.memory_space<vmem>>, vector<1x16xf32>
    %18 = vector.broadcast %17 : vector<1x16xf32> to vector<8x16xf32>
    %19 = arith.addf %16, %18 : vector<8x16xf32>
    %cst_17 = arith.constant dense<0xFF800000> : vector<8xf32>
    %20 = vector.multi_reduction <maximumf>, %19, %cst_17 [1] : vector<8x16xf32> to vector<8xf32>
    %21 = vector.shape_cast %20 : vector<8xf32> to vector<8x1xf32>
    %22 = vector.broadcast %21 : vector<8x1xf32> to vector<8x16xf32>
    %23 = arith.subf %19, %22 : vector<8x16xf32>
    %24 = math.exp %23 : vector<8x16xf32>
    %cst_18 = arith.constant dense<0.000000e+00> : vector<8xf32>
    %25 = vector.multi_reduction <add>, %24, %cst_18 [1] : vector<8x16xf32> to vector<8xf32>
    %26 = vector.shape_cast %25 : vector<8xf32> to vector<8x1xf32>
    %27 = tpu.reciprocal %26 {approx = true} : vector<8x1xf32> -> vector<8x1xf32>
    %28 = vector.broadcast %27 : vector<8x1xf32> to vector<8x16xf32>
    %29 = arith.mulf %24, %28 : vector<8x16xf32>
    %c0_19 = arith.constant 0 : index
    %c0_20 = arith.constant 0 : index
    %c0_21 = arith.constant 0 : index
    %30 = vector.load %arg8[%c0_19, %c0_20, %c0_21] : memref<1x8x16xf32, #tpu.memory_space<vmem>>, vector<1x8x16xf32>
    %31 = vector.shape_cast %30 : vector<1x8x16xf32> to vector<8x16xf32>
    %32 = vector.shape_cast %29 : vector<8x16xf32> to vector<1x8x16xf32>
    tpu.vector_store %arg8[%c0_19, %c0_20, %c0_21], %32 {strides = array<i32>} : memref<1x8x16xf32, #tpu.memory_space<vmem>>, vector<1x8x16xf32>,
    %c0_22 = arith.constant 0 : index
    %c0_23 = arith.constant 0 : index
    %33 = vector.load %arg10[%c0_22, %c0_23] : memref<8x32xf32, #tpu.memory_space<vmem>>, vector<8x32xf32>
    tpu.vector_store %arg10[%c0_22, %c0_23], %14 {strides = array<i32>} : memref<8x32xf32, #tpu.memory_space<vmem>>, vector<8x32xf32>,
    %c7_i32 = arith.constant 7 : i32
    %34 = arith.cmpi eq, %arg0, %c7_i32 : i32
    %35 = arith.extui %34 : i1 to i32
    %c0_i32_24 = arith.constant 0 : i32
    %36 = arith.cmpi ne, %35, %c0_i32_24 : i32
    scf.if %36 {
      %c0_25 = arith.constant 0 : index
      %c0_26 = arith.constant 0 : index
      %37 = vector.load %arg9[%c0_25, %c0_26] : memref<8x32xf32, #tpu.memory_space<vmem>>, vector<8x32xf32>
      tpu.vector_store %arg9[%c0_25, %c0_26], %14 {strides = array<i32>} : memref<8x32xf32, #tpu.memory_space<vmem>>, vector<8x32xf32>,
    } else {
    }
    return
  }
  func.func @transform_0(%arg0: i32) -> (i32, i32, i32) {
    %c0_i32 = arith.constant 0 : i32
    %c0_i32_0 = arith.constant 0 : i32
    %c0_i32_1 = arith.constant 0 : i32
    return %arg0, %c0_i32, %c0_i32_0 : i32, i32, i32
  }
  func.func @transform_1(%arg0: i32) -> (i32, i32) {
    %c0_i32 = arith.constant 0 : i32
    %c0_i32_0 = arith.constant 0 : i32
    %c0_i32_1 = arith.constant 0 : i32
    return %c0_i32, %c0_i32_0 : i32, i32
  }
  func.func @transform_2(%arg0: i32) -> (i32, i32) {
    %c0_i32 = arith.constant 0 : i32
    %c0_i32_0 = arith.constant 0 : i32
    %c0_i32_1 = arith.constant 0 : i32
    return %c0_i32, %c0_i32_0 : i32, i32
  }
  func.func @transform_3(%arg0: i32) -> (i32, i32) {
    %c0_i32 = arith.constant 0 : i32
    %c0_i32_0 = arith.constant 0 : i32
    %c0_i32_1 = arith.constant 0 : i32
    return %c0_i32, %c0_i32_0 : i32, i32
  }
  func.func @transform_4(%arg0: i32) -> (i32, i32) {
    %c0_i32 = arith.constant 0 : i32
    %c0_i32_0 = arith.constant 0 : i32
    %c0_i32_1 = arith.constant 0 : i32
    return %c0_i32, %c0_i32_0 : i32, i32
  }
  func.func @transform_5(%arg0: i32) -> (i32, i32) {
    %c0_i32 = arith.constant 0 : i32
    %c0_i32_0 = arith.constant 0 : i32
    %c0_i32_1 = arith.constant 0 : i32
    return %c0_i32, %c0_i32_0 : i32, i32
  }
  func.func @transform_6(%arg0: i32) -> (i32, i32) {
    %c0_i32 = arith.constant 0 : i32
    %c0_i32_0 = arith.constant 0 : i32
    %c0_i32_1 = arith.constant 0 : i32
    return %c0_i32, %c0_i32_0 : i32, i32
  }
  func.func @transform_7(%arg0: i32) -> (i32, i32, i32) {
    %c0_i32 = arith.constant 0 : i32
    %c0_i32_0 = arith.constant 0 : i32
    %c0_i32_1 = arith.constant 0 : i32
    return %arg0, %c0_i32, %c0_i32_0 : i32, i32, i32
  }
  func.func @transform_8(%arg0: i32) -> (i32, i32) {
    %c0_i32 = arith.constant 0 : i32
    %c0_i32_0 = arith.constant 0 : i32
    %c0_i32_1 = arith.constant 0 : i32
    return %c0_i32, %c0_i32_0 : i32, i32
  }
}

</mosaic_0001>

<llo_original>
// kernel: tpu_custom_call.1
$region0: #{tpu_custom_call.1}
  #allocation0 [shape = 'u32[]', space=smem, size = 0x4, offset = 0x4, fixed_abs, tag = 'smem constant byte address 0x4 - core index']
  #allocation1 [shape = 'u32[144,128]{1,0:T(1,128)}', space=vmem, size = 0x12000, scoped, tag = 'internal scratch']
  #allocation2 [shape = 'f32[8,32]{1,0:T(8,128)}', space=vmem, size = 0x1000, scoped, tag = 'scratch operand']
  %s0 = inlined_call_operand.vmem [shape: f32[8,8,16], index: 0, kind: input, shape index: {}]
  %s1 = inlined_call_operand.hbm [shape: f32[8,32], index: 1, kind: input, shape index: {}]
  %s2 = inlined_call_operand.hbm [shape: f32[16,48], index: 2, kind: input, shape index: {}]
  %s3 = inlined_call_operand.hbm [shape: f32[32,48], index: 3, kind: input, shape index: {}]
  %s4 = inlined_call_operand.vmem [shape: f32[1,48], index: 4, kind: input, shape index: {}]
  %s5 = inlined_call_operand.vmem [shape: f32[48,16], index: 5, kind: input, shape index: {}]
  %s6 = inlined_call_operand.vmem [shape: f32[1,16], index: 6, kind: input, shape index: {}]
  %s7 = inlined_call_operand.hbm [shape: f32[8,8,16], index: 7, kind: output, shape index: {0}]
  %s8 = inlined_call_operand.hbm [shape: f32[8,32], index: 8, kind: output, shape index: {1}]
  %9 = xla_tuple %s7, %s8
  %s10 = sld [smem:[#allocation0]]
  $region89: #{tpu_custom_call.1} parent=0
    _
  %s12 = ssub.s32 1, %s10
  %s13 = scalar_select 0, %s12, %s10
  $region1: #{tpu_custom_call.1} parent=0
    #allocation3 [shape = 'u8[4096]{0}', space=vmem, size = 0x1000, scoped, tag = 'input window, operand 1, single buffered']
    #allocation4 [shape = 's32[2]{0}', space=sflag, size = 0x8, scoped, tag = 'scoped memory for tpu_custom_call.1']
    #allocation5 [shape = 's32[2]{0}', space=sflag, size = 0x8, scoped, tag = 'scoped memory for tpu_custom_call.1']
    #allocation6 [shape = 'u8[8192]{0}', space=vmem, size = 0x2000, scoped, tag = 'input window, operand 2, single buffered']
    #allocation7 [shape = 's32[1]{0}', space=sflag, size = 0x4, scoped, tag = 'scoped memory for tpu_custom_call.1']
    #allocation8 [shape = 'u8[16384]{0}', space=vmem, size = 0x4000, scoped, tag = 'input window, operand 3, single buffered']
    #allocation9 [shape = 'u8[8192]{0}', space=vmem, size = 0x2000, scoped, tag = 'output window, operand 0']
    #allocation10 [shape = 'u8[4096]{0}', space=vmem, size = 0x1000, scoped, tag = 'output window, operand 1, single buffered']
    #allocation11 [shape = 's32[1]{0}', space=sflag, size = 0x4, scoped, tag = 'scoped memory for tpu_custom_call.1']
    %14 = vsyncpa [#allocation4], 0
    %15 = vsyncpa [#allocation7], 0
    %16 = vsyncpa [#allocation5], 0
    %s17 = scalar_lea.sflag [#allocation5], 1
    %18 = vsyncpa %s17, 0
    %19 = vsyncpa [#allocation11], 0
    loop: start=0, step=1, limit=10
    $region2: #{tpu_custom_call.1} parent=1 // loop_pre_header
      _
    $region3: #{tpu_custom_call.1} parent=1 // loop_header
      %s21 = sphi 0, %s25
      %p22 = scmp.ge.s32.totalorder %s21, 10
      %s31 = sphi 0, %s33
      %s34 = sphi 0, %s31
      %s35 = sphi 0, %s34
      %s51 = sphi 0, %s35
      %s55 = sphi 0, %s55
      %s57 = sphi 0, %s55
      %s58 = sphi 0, %s57
      %s72 = sphi 0, %s58
      %s76 = sphi 0, %s76
      %s78 = sphi 0, %s76
      %s79 = sphi 0, %s78
      %s93 = sphi 0, %s79
      %s97 = sphi 0, %s97
      %s99 = sphi 0, %s97
      %s100 = sphi 0, %s99
      %s114 = sphi 0, %s100
      %s118 = sphi 0, %s118
      %s120 = sphi 0, %s118
      %s121 = sphi 0, %s120
      %s135 = sphi 0, %s121
      %s139 = sphi 0, %s139
      %s141 = sphi 0, %s139
      %s142 = sphi 0, %s141
      %s156 = sphi 0, %s142
      %s160 = sphi 0, %s160
      %s162 = sphi 0, %s160
      %s163 = sphi 0, %s162
      %s177 = sphi 0, %s163
      %s183 = sphi 0, %s185
      %s186 = sphi 0, %s183
      %s187 = sphi 0, %s186
      %s203 = sphi 0, %s187
      %s207 = sphi 0, %s207
      %s209 = sphi 0, %s207
      %s210 = sphi 0, %s209
      %s224 = sphi 0, %s210
    $region4: #{tpu_custom_call.1} parent=1 // loop_header_branch
      %24 = sbr.rel (%p22) target = $region8
    $region5: #{tpu_custom_call.1} parent=1 // loop_body
      %s26 = ssub.s32 %s21, 1
      %s27 = ssub.s32 %s21, 2
      %s28 = sadd.s32 %s21, 1
      %s29 = ssub.s32 %s21, %s28
      %p30 = scmp.eq.s32.totalorder %s29, 0
      %s32 = sadd.s32 %s31, 1
      %s33 = scalar_select %p30, %s31, %s32
      %p36 = pneg %p30
      %p37 = scmp.eq.s32.totalorder %s21, 7
      %p38 = por %p36, %p37
      %p39 = scmp.ne.s32.totalorder %s31, %s34
      %p40 = scmp.eq.s32.totalorder %s21, 0
      %p41 = por %p39, %p40
      %p42 = scmp.ne.s32.totalorder %s31, %s34
      %p43 = scmp.eq.s32.totalorder %s26, 7
      %p44 = por %p42, %p43
      %p45 = scmp.ne.s32.totalorder %s34, %s35
      %p46 = scmp.eq.s32.totalorder %s26, 0
      %p47 = por %p45, %p46
      %p48 = scmp.ne.s32.totalorder %s34, %s35
      %p49 = scmp.eq.s32.totalorder %s27, 7
      %p50 = por %p48, %p49
      %p52 = scmp.ne.s32.totalorder %s35, %s51
      %p53 = scmp.eq.s32.totalorder %s27, 0
      %p54 = por %p52, %p53
      %s56 = sadd.s32 %s55, 1
      %p59 = scmp.eq.s32.totalorder %s21, 7
      %p60 = scmp.ne.s32.totalorder %s55, %s57
      %p61 = scmp.eq.s32.totalorder %s21, 0
      %p62 = por %p60, %p61
      %p63 = scmp.ne.s32.totalorder %s55, %s57
      %p64 = scmp.eq.s32.totalorder %s26, 7
      %p65 = por %p63, %p64
      %p66 = scmp.ne.s32.totalorder %s57, %s58
      %p67 = scmp.eq.s32.totalorder %s26, 0
      %p68 = por %p66, %p67
      %p69 = scmp.ne.s32.totalorder %s57, %s58
      %p70 = scmp.eq.s32.totalorder %s27, 7
      %p71 = por %p69, %p70
      %p73 = scmp.ne.s32.totalorder %s58, %s72
      %p74 = scmp.eq.s32.totalorder %s27, 0
      %p75 = por %p73, %p74
      %s77 = sadd.s32 %s76, 1
      %p80 = scmp.eq.s32.totalorder %s21, 7
      %p81 = scmp.ne.s32.totalorder %s76, %s78
      %p82 = scmp.eq.s32.totalorder %s21, 0
      %p83 = por %p81, %p82
      %p84 = scmp.ne.s32.totalorder %s76, %s78
      %p85 = scmp.eq.s32.totalorder %s26, 7
      %p86 = por %p84, %p85
      %p87 = scmp.ne.s32.totalorder %s78, %s79
      %p88 = scmp.eq.s32.totalorder %s26, 0
      %p89 = por %p87, %p88
      %p90 = scmp.ne.s32.totalorder %s78, %s79
      %p91 = scmp.eq.s32.totalorder %s27, 7
      %p92 = por %p90, %p91
      %p94 = scmp.ne.s32.totalorder %s79, %s93
      %p95 = scmp.eq.s32.totalorder %s27, 0
      %p96 = por %p94, %p95
      %s98 = sadd.s32 %s97, 1
      %p101 = scmp.eq.s32.totalorder %s21, 7
      %p102 = scmp.ne.s32.totalorder %s97, %s99
      %p103 = scmp.eq.s32.totalorder %s21, 0
      %p104 = por %p102, %p103
      %p105 = scmp.ne.s32.totalorder %s97, %s99
      %p106 = scmp.eq.s32.totalorder %s26, 7
      %p107 = por %p105, %p106
      %p108 = scmp.ne.s32.totalorder %s99, %s100
      %p109 = scmp.eq.s32.totalorder %s26, 0
      %p110 = por %p108, %p109
      %p111 = scmp.ne.s32.totalorder %s99, %s100
      %p112 = scmp.eq.s32.totalorder %s27, 7
      %p113 = por %p111, %p112
      %p115 = scmp.ne.s32.totalorder %s100, %s114
      %p116 = scmp.eq.s32.totalorder %s27, 0
      %p117 = por %p115, %p116
      %s119 = sadd.s32 %s118, 1
      %p122 = scmp.eq.s32.totalorder %s21, 7
      %p123 = scmp.ne.s32.totalorder %s118, %s120
      %p124 = scmp.eq.s32.totalorder %s21, 0
      %p125 = por %p123, %p124
      %p126 = scmp.ne.s32.totalorder %s118, %s120
      %p127 = scmp.eq.s32.totalorder %s26, 7
      %p128 = por %p126, %p127
      %p129 = scmp.ne.s32.totalorder %s120, %s121
      %p130 = scmp.eq.s32.totalorder %s26, 0
      %p131 = por %p129, %p130
      %p132 = scmp.ne.s32.totalorder %s120, %s121
      %p133 = scmp.eq.s32.totalorder %s27, 7
      %p134 = por %p132, %p133
      %p136 = scmp.ne.s32.totalorder %s121, %s135
      %p137 = scmp.eq.s32.totalorder %s27, 0
      %p138 = por %p136, %p137
      %s140 = sadd.s32 %s139, 1
      %p143 = scmp.eq.s32.totalorder %s21, 7
      %p144 = scmp.ne.s32.totalorder %s139, %s141
      %p145 = scmp.eq.s32.totalorder %s21, 0
      %p146 = por %p144, %p145
      %p147 = scmp.ne.s32.totalorder %s139, %s141
      %p148 = scmp.eq.s32.totalorder %s26, 7
      %p149 = por %p147, %p148
      %p150 = scmp.ne.s32.totalorder %s141, %s142
      %p151 = scmp.eq.s32.totalorder %s26, 0
      %p152 = por %p150, %p151
      %p153 = scmp.ne.s32.totalorder %s141, %s142
      %p154 = scmp.eq.s32.totalorder %s27, 7
      %p155 = por %p153, %p154
      %p157 = scmp.ne.s32.totalorder %s142, %s156
      %p158 = scmp.eq.s32.totalorder %s27, 0
      %p159 = por %p157, %p158
      %s161 = sadd.s32 %s160, 1
      %p164 = scmp.eq.s32.totalorder %s21, 7
      %p165 = scmp.ne.s32.totalorder %s160, %s162
      %p166 = scmp.eq.s32.totalorder %s21, 0
      %p167 = por %p165, %p166
      %p168 = scmp.ne.s32.totalorder %s160, %s162
      %p169 = scmp.eq.s32.totalorder %s26, 7
      %p170 = por %p168, %p169
      %p171 = scmp.ne.s32.totalorder %s162, %s163
      %p172 = scmp.eq.s32.totalorder %s26, 0
      %p173 = por %p171, %p172
      %p174 = scmp.ne.s32.totalorder %s162, %s163
      %p175 = scmp.eq.s32.totalorder %s27, 7
      %p176 = por %p174, %p175
      %p178 = scmp.ne.s32.totalorder %s163, %s177
      %p179 = scmp.eq.s32.totalorder %s27, 0
      %p180 = por %p178, %p179
      %s181 = ssub.s32 %s21, %s28
      %p182 = scmp.eq.s32.totalorder %s181, 0
      %s184 = sadd.s32 %s183, 1
      %s185 = scalar_select %p182, %s183, %s184
      %p188 = pneg %p182
      %p189 = scmp.eq.s32.totalorder %s21, 7
      %p190 = por %p188, %p189
      %p191 = scmp.ne.s32.totalorder %s183, %s186
      %p192 = scmp.eq.s32.totalorder %s21, 0
      %p193 = por %p191, %p192
      %p194 = scmp.ne.s32.totalorder %s183, %s186
      %p195 = scmp.eq.s32.totalorder %s26, 7
      %p196 = por %p194, %p195
      %p197 = scmp.ne.s32.totalorder %s186, %s187
      %p198 = scmp.eq.s32.totalorder %s26, 0
      %p199 = por %p197, %p198
      %p200 = scmp.ne.s32.totalorder %s186, %s187
      %p201 = scmp.eq.s32.totalorder %s27, 7
      %p202 = por %p200, %p201
      %p204 = scmp.ne.s32.totalorder %s187, %s203
      %p205 = scmp.eq.s32.totalorder %s27, 0
      %p206 = por %p204, %p205
      %s208 = sadd.s32 %s207, 1
      %p211 = scmp.eq.s32.totalorder %s21, 7
      %p212 = scmp.ne.s32.totalorder %s207, %s209
      %p213 = scmp.eq.s32.totalorder %s21, 0
      %p214 = por %p212, %p213
      %p215 = scmp.ne.s32.totalorder %s207, %s209
      %p216 = scmp.eq.s32.totalorder %s26, 7
      %p217 = por %p215, %p216
      %p218 = scmp.ne.s32.totalorder %s209, %s210
      %p219 = scmp.eq.s32.totalorder %s26, 0
      %p220 = por %p218, %p219
      %p221 = scmp.ne.s32.totalorder %s209, %s210
      %p222 = scmp.eq.s32.totalorder %s27, 7
      %p223 = por %p221, %p222
      %p225 = scmp.ne.s32.totalorder %s210, %s224
      %p226 = scmp.eq.s32.totalorder %s27, 0
      %p227 = por %p225, %p226
      %p228 = scmp.le.s32.totalorder 1, %s21
      %p229 = scmp.lt.s32.totalorder %s21, 9
      %p230 = pnand %p228, %p229
      %p231 = pneg %p230
      // Predicated region
      $region9: #{tpu_custom_call.1} parent=5 // pred_check
        _
      $region10: #{tpu_custom_call.1} parent=5 // pred_check_branch
        %233 = sbr.rel (%p230) target = $region12
      $region11: #{tpu_custom_call.1} parent=5 // pred_region
        %s234 = ssub.s32 %s21, 1
        // Predicated region
        $region13: #{tpu_custom_call.1} parent=11 // pred_check
          %p235 = pneg %p68
        $region14: #{tpu_custom_call.1} parent=11 // pred_check_branch
          %237 = sbr.rel (%p235) target = $region16
        $region15: #{tpu_custom_call.1} parent=11 // pred_region
          %s239 = ssub.s32 128, 128
          %240 = vsyncadd [#allocation4], %s239
          %s242 = sshll.u32 [#allocation3], 4
          %s243 = int_to_ptr.vmem [resolvable:$true] %s242
          %245 = dma.hbm_to_vmem [thread:$0]  %s1, 128, %s243, [#allocation4]
        $region16: #{tpu_custom_call.1} parent=11 // pred_fallthru
          _
        // Predicated region
        $region17: #{tpu_custom_call.1} parent=11 // pred_check
          %p246 = pneg %p89
        $region18: #{tpu_custom_call.1} parent=11 // pred_check_branch
          %248 = sbr.rel (%p246) target = $region20
        $region19: #{tpu_custom_call.1} parent=11 // pred_region
          %s250 = ssub.s32 256, 256
          %251 = vsyncadd [#allocation7], %s250
          %s252 = sshll.u32 [#allocation6], 4
          %s253 = int_to_ptr.vmem [resolvable:$true] %s252
          %258 = dma.hbm_to_vmem [thread:$0]  %s2, 256, %s253, [#allocation7], 128, 128, 8
        $region20: #{tpu_custom_call.1} parent=11 // pred_fallthru
          _
        // Predicated region
        $region21: #{tpu_custom_call.1} parent=11 // pred_check
          %p259 = pneg %p110
        $region22: #{tpu_custom_call.1} parent=11 // pred_check_branch
          %261 = sbr.rel (%p259) target = $region24
        $region23: #{tpu_custom_call.1} parent=11 // pred_region
          %s263 = ssub.s32 512, 512
          %264 = vsyncadd [#allocation7], %s263
          %s265 = sshll.u32 [#allocation8], 4
          %s266 = int_to_ptr.vmem [resolvable:$true] %s265
          %271 = dma.hbm_to_vmem [thread:$0]  %s3, 512, %s266, [#allocation7], 128, 128, 8
        $region24: #{tpu_custom_call.1} parent=11 // pred_fallthru
          _
        // Predicated region
        $region25: #{tpu_custom_call.1} parent=11 // pred_check
          %p272 = pneg %p131
        $region26: #{tpu_custom_call.1} parent=11 // pred_check_branch
          %274 = sbr.rel (%p272) target = $region28
        $region27: #{tpu_custom_call.1} parent=11 // pred_region
          _
        $region28: #{tpu_custom_call.1} parent=11 // pred_fallthru
          _
        // Predicated region
        $region29: #{tpu_custom_call.1} parent=11 // pred_check
          %p275 = pneg %p152
        $region30: #{tpu_custom_call.1} parent=11 // pred_check_branch
          %277 = sbr.rel (%p275) target = $region32
        $region31: #{tpu_custom_call.1} parent=11 // pred_region
          _
        $region32: #{tpu_custom_call.1} parent=11 // pred_fallthru
          _
        // Predicated region
        $region33: #{tpu_custom_call.1} parent=11 // pred_check
          %p278 = pneg %p173
        $region34: #{tpu_custom_call.1} parent=11 // pred_check_branch
          %280 = sbr.rel (%p278) target = $region36
        $region35: #{tpu_custom_call.1} parent=11 // pred_region
          _
        $region36: #{tpu_custom_call.1} parent=11 // pred_fallthru
          _
      $region12: #{tpu_custom_call.1} parent=5 // pred_fallthru
        _
      %p281 = scmp.lt.s32.totalorder %s21, 8
      // Predicated region
      $region37: #{tpu_custom_call.1} parent=5 // pred_check
        %p282 = pneg %p281
      $region38: #{tpu_custom_call.1} parent=5 // pred_check_branch
        %284 = sbr.rel (%p282) target = $region40
      $region39: #{tpu_custom_call.1} parent=5 // pred_region
        // Predicated region
        $region41: #{tpu_custom_call.1} parent=39 // pred_check
          %p285 = pneg %p41
        $region42: #{tpu_custom_call.1} parent=39 // pred_check_branch
          %287 = sbr.rel (%p285) target = $region44
        $region43: #{tpu_custom_call.1} parent=39 // pred_region
          %p288 = scmp.lt.s32.totalorder %s21, 7
          %s289 = scalar_select %p288, %s21, 7
          %s290 = smul.addr %s289, 8
          %s291 = scalar_lea.vmem %s0, %s290
        $region44: #{tpu_custom_call.1} parent=39 // pred_fallthru
          _
      $region40: #{tpu_custom_call.1} parent=5 // pred_fallthru
        _
      %p292 = scmp.le.s32.totalorder 1, %s21
      %p293 = scmp.lt.s32.totalorder %s21, 9
      %p294 = pnand %p292, %p293
      %p295 = pneg %p294
      // Predicated region
      $region45: #{tpu_custom_call.1} parent=5 // pred_check
        _
      $region46: #{tpu_custom_call.1} parent=5 // pred_check_branch
        %297 = sbr.rel (%p294) target = $region48
      $region47: #{tpu_custom_call.1} parent=5 // pred_region
        %s298 = ssub.s32 %s21, 1
        // Predicated region
        $region49: #{tpu_custom_call.1} parent=47 // pred_check
          %p299 = pneg %p68
        $region50: #{tpu_custom_call.1} parent=47 // pred_check_branch
          %301 = sbr.rel (%p299) target = $region52
        $region51: #{tpu_custom_call.1} parent=47 // pred_region
          %302 = dma.done [#allocation4], 128
        $region52: #{tpu_custom_call.1} parent=47 // pred_fallthru
          _
        // Predicated region
        $region53: #{tpu_custom_call.1} parent=47 // pred_check
          %p303 = pneg %p89
        $region54: #{tpu_custom_call.1} parent=47 // pred_check_branch
          %305 = sbr.rel (%p303) target = $region56
        $region55: #{tpu_custom_call.1} parent=47 // pred_region
          %306 = dma.done [#allocation7], 256
        $region56: #{tpu_custom_call.1} parent=47 // pred_fallthru
          _
        // Predicated region
        $region57: #{tpu_custom_call.1} parent=47 // pred_check
          %p307 = pneg %p110
        $region58: #{tpu_custom_call.1} parent=47 // pred_check_branch
          %309 = sbr.rel (%p307) target = $region60
        $region59: #{tpu_custom_call.1} parent=47 // pred_region
          %310 = dma.done [#allocation7], 512
        $region60: #{tpu_custom_call.1} parent=47 // pred_fallthru
          _
        %p311 = scmp.lt.s32.totalorder %s26, 7
        %s312 = scalar_select %p311, %s26, 7
        %s313 = smul.addr %s312, 8
        %s314 = scalar_lea.vmem %s0, %s313
        %p315 = pneg %p47
        %p316 = pneg %p44
        %p317 = pneg %p68
        %p318 = pneg %p65
        %p319 = pneg %p89
        %p320 = pneg %p86
        %p321 = pneg %p110
        %p322 = pneg %p107
        %p323 = pneg %p131
        %p324 = pneg %p128
        %p325 = pneg %p152
        %p326 = pneg %p149
        %p327 = pneg %p173
        %p328 = pneg %p170
        %p329 = pneg %p199
        %p330 = pneg %p196
        %s331 = sand.u32 %s186, 1
        %s332 = scalar_lea.sflag [#allocation5], %s331
        %s333 = sand.u32 %s186, 1
        %s334 = smul.addr %s333, 8
        %s335 = scalar_lea.vmem [#allocation9], %s334
        %p336 = pneg %p220
        %p337 = pneg %p217
        %p338 = scmp.lt.s32.totalorder %s26, 7
        %s339 = scalar_select %p338, %s26, 7
        %s340 = smul.addr %s339, 8
        %s341 = scalar_lea.vmem %s0, %s340
        %p342 = scmp.eq.s32.totalorder %s26, 0
        // Predicated region
        $region61: #{tpu_custom_call.1} parent=47 // pred_check
          %p343 = pneg %p342
        $region62: #{tpu_custom_call.1} parent=47 // pred_check_branch
          %345 = sbr.rel (%p343) target = $region64
        $region63: #{tpu_custom_call.1} parent=47 // pred_region
          %v346 = vld [vmem:[#allocation3] sm:$0xff]
          %vm347 = vcmask 261120
          %348 = vst.msk [vmem:[#allocation2] sm:$0xff] %vm347, %v346
        $region64: #{tpu_custom_call.1} parent=47 // pred_fallthru
          _
        %v349 = vld [vmem:[%s341] sm:$0xff]
        %v350 = vld [vmem:[#allocation2] sm:$0xff]
        %v351 = vld [vmem:[#allocation6] sm:$0xff]
        %v352 = vld [vmem:[#allocation6 + $0x8] sm:$0xff]
        %v353 = vld [vmem:[#allocation8] sm:$0xff]
        %v354 = vld [vmem:[#allocation8 + $0x8] sm:$0xff]
        %v355 = vld [vmem:[#allocation8 + $0x10] sm:$0xff]
        %v356 = vld [vmem:[#allocation8 + $0x18] sm:$0xff]
        %vm357 = vcmask 261120
        %v359 = vsel %vm357, %v350, 0
        %361 = vmatprep.subr.mxu0 0.0
        %362 = vmatpush1.msra.mxu0 %v353
        %363 = vmatprep.subr.mxu0 0.0
        %364 = vmatpush1.msra.mxu0 %v354
        %365 = vmatprep.subr.mxu0 0.0
        %366 = vmatpush1.msra.mxu0 %v355
        %367 = vmatprep.subr.mxu0 0.0
        %368 = vmatpush1.msra.mxu0 %v356
        %369 = vmatprep.subr.mxu0 0.0
        %370 = vmatpush1.msra.mxu0 0.0
        %371 = vmatprep.subr.mxu0 0.0
        %372 = vmatpush1.msra.mxu0 0.0
        %373 = vmatprep.subr.mxu0 0.0
        %374 = vmatpush1.msra.mxu0 0.0
        %375 = vmatprep.subr.mxu0 0.0
        %376 = vmatpush1.msra.mxu0 0.0
        %377 = vmatprep.subr.mxu0 0.0
        %378 = vmatpush1.msra.mxu0 0.0
        %379 = vmatprep.subr.mxu0 0.0
        %380 = vmatpush1.msra.mxu0 0.0
        %381 = vmatprep.subr.mxu0 0.0
        %382 = vmatpush1.msra.mxu0 0.0
        %383 = vmatprep.subr.mxu0 0.0
        %384 = vmatpush1.msra.mxu0 0.0
        %385 = vmatprep.subr.mxu0 0.0
        %386 = vmatpush1.msra.mxu0 0.0
        %387 = vmatprep.subr.mxu0 0.0
        %388 = vmatpush1.msra.mxu0 0.0
        %389 = vmatprep.subr.mxu0 0.0
        %390 = vmatpush1.msra.mxu0 0.0
        %391 = vmatprep.subr.mxu0 0.0
        %392 = vmatpush1.msra.mxu0 0.0
        %393 = vmatprep.subr.mxu0 0.0
        %394 = vmatpush1.msra.mxu0 0.0
        %395 = vmatprep.subr.mxu0 0.0
        %396 = vmatpush1.msra.mxu0 0.0
        %397 = vmatprep.subr.mxu0 0.0
        %398 = vmatpush1.msra.mxu0 0.0
        %399 = vmatprep.subr.mxu0 0.0
        %400 = vmatpush1.msra.mxu0 0.0
        %401 = vmatprep.subr.mxu0 0.0
        %402 = vmatpush1.msra.mxu0 0.0
        %403 = vmatprep.subr.mxu0 0.0
        %404 = vmatpush1.msra.mxu0 0.0
        %405 = vmatprep.subr.mxu0 0.0
        %406 = vmatpush1.msra.mxu0 0.0
        %407 = vmatprep.subr.mxu0 0.0
        %408 = vmatpush1.msra.mxu0 0.0
        %409 = vmatprep.subr.mxu0 0.0
        %410 = vmatpush1.msra.mxu0 0.0
        %411 = vmatprep.subr.mxu0 0.0
        %412 = vmatpush1.msra.mxu0 0.0
        %413 = vmatprep.subr.mxu0 0.0
        %414 = vmatpush1.msra.mxu0 0.0
        %415 = vmatprep.subr.mxu0 0.0
        %416 = vmatpush1.msra.mxu0 0.0
        %417 = vmatprep.subr.mxu0 0.0
        %418 = vmatpush1.msra.mxu0 0.0
        %419 = vmatprep.subr.mxu0 0.0
        %420 = vmatpush1.msra.mxu0 0.0
        %421 = vmatprep.subr.mxu0 0.0
        %422 = vmatpush1.msra.mxu0 0.0
        %423 = vmatprep.subr.mxu0 0.0
        %424 = vmatpush1.msra.mxu0 0.0
        %425 = vmatprep.mubr.f32.mxu0 0.0
        %426 = vmatmul.mubr.f32.gmra.mrb[0].mxu0 %v359
        %v427 = vpop.f32.mrb[0].mxu0
        %v428 = vadd.f32 0.0, %v427
        %v429 = vpop.f32.mrb[0].mxu0
        %430 = vdwg.mxu0
        %vm431 = vcmask 130048
        %v433 = vsel %vm431, %v349, 0
        %435 = vmatprep.subr.mxu0 0.0
        %436 = vmatpush1.msra.mxu0 %v351
        %437 = vmatprep.subr.mxu0 0.0
        %438 = vmatpush1.msra.mxu0 %v352
        %439 = vmatprep.subr.mxu0 0.0
        %440 = vmatpush1.msra.mxu0 0.0
        %441 = vmatprep.subr.mxu0 0.0
        %442 = vmatpush1.msra.mxu0 0.0
        %443 = vmatprep.subr.mxu0 0.0
        %444 = vmatpush1.msra.mxu0 0.0
        %445 = vmatprep.subr.mxu0 0.0
        %446 = vmatpush1.msra.mxu0 0.0
        %447 = vmatprep.subr.mxu0 0.0
        %448 = vmatpush1.msra.mxu0 0.0
        %449 = vmatprep.subr.mxu0 0.0
        %450 = vmatpush1.msra.mxu0 0.0
        %451 = vmatprep.subr.mxu0 0.0
        %452 = vmatpush1.msra.mxu0 0.0
        %453 = vmatprep.subr.mxu0 0.0
        %454 = vmatpush1.msra.mxu0 0.0
        %455 = vmatprep.subr.mxu0 0.0
        %456 = vmatpush1.msra.mxu0 0.0
        %457 = vmatprep.subr.mxu0 0.0
        %458 = vmatpush1.msra.mxu0 0.0
        %459 = vmatprep.subr.mxu0 0.0
        %460 = vmatpush1.msra.mxu0 0.0
        %461 = vmatprep.subr.mxu0 0.0
        %462 = vmatpush1.msra.mxu0 0.0
        %463 = vmatprep.subr.mxu0 0.0
        %464 = vmatpush1.msra.mxu0 0.0
        %465 = vmatprep.subr.mxu0 0.0
        %466 = vmatpush1.msra.mxu0 0.0
        %467 = vmatprep.subr.mxu0 0.0
        %468 = vmatpush1.msra.mxu0 0.0
        %469 = vmatprep.subr.mxu0 0.0
        %470 = vmatpush1.msra.mxu0 0.0
        %471 = vmatprep.subr.mxu0 0.0
        %472 = vmatpush1.msra.mxu0 0.0
        %473 = vmatprep.subr.mxu0 0.0
        %474 = vmatpush1.msra.mxu0 0.0
        %475 = vmatprep.subr.mxu0 0.0
        %476 = vmatpush1.msra.mxu0 0.0
        %477 = vmatprep.subr.mxu0 0.0
        %478 = vmatpush1.msra.mxu0 0.0
        %479 = vmatprep.subr.mxu0 0.0
        %480 = vmatpush1.msra.mxu0 0.0
        %481 = vmatprep.subr.mxu0 0.0
        %482 = vmatpush1.msra.mxu0 0.0
        %483 = vmatprep.subr.mxu0 0.0
        %484 = vmatpush1.msra.mxu0 0.0
        %485 = vmatprep.subr.mxu0 0.0
        %486 = vmatpush1.msra.mxu0 0.0
        %487 = vmatprep.subr.mxu0 0.0
        %488 = vmatpush1.msra.mxu0 0.0
        %489 = vmatprep.subr.mxu0 0.0
        %490 = vmatpush1.msra.mxu0 0.0
        %491 = vmatprep.subr.mxu0 0.0
        %492 = vmatpush1.msra.mxu0 0.0
        %493 = vmatprep.subr.mxu0 0.0
        %494 = vmatpush1.msra.mxu0 0.0
        %495 = vmatprep.subr.mxu0 0.0
        %496 = vmatpush1.msra.mxu0 0.0
        %497 = vmatprep.subr.mxu0 0.0
        %498 = vmatpush1.msra.mxu0 0.0
        %499 = vmatprep.mubr.f32.mxu0 0.0
        %500 = vmatmul.mubr.f32.gmra.mrb[0].mxu0 %v433
        %v501 = vpop.f32.mrb[0].mxu0
        %v502 = vadd.f32 %v428, %v501
        %v503 = vpop.f32.mrb[0].mxu0
        %504 = vdwg.mxu0
        %v505 = vld [vmem:[%s4] sm:$0x1]
        %v507 = vlaneseq
        %v508 = vshrl.u32 %v507, 7
        %v509 = vsub.s32 0, %v508
        %v510 = vrot.slane %v505, %v509
        %v512 = vadd.f32 %v502, %v510
        %v513 = vld [vmem:[%s5] sm:$0xff]
        %v514 = vld [vmem:[%s5 + $0x8] sm:$0xff]
        %v515 = vld [vmem:[%s5 + $0x10] sm:$0xff]
        %v516 = vld [vmem:[%s5 + $0x18] sm:$0xff]
        %v517 = vld [vmem:[%s5 + $0x20] sm:$0xff]
        %v518 = vld [vmem:[%s5 + $0x28] sm:$0xff]
        %v519 = vld [vmem:[%s6] sm:$0x1]
        %v521 = vlaneseq
        %v522 = vshrl.u32 %v521, 7
        %v523 = vsub.s32 0, %v522
        %v524 = vrot.slane %v519, %v523
        %vm526 = vcmask 392192
        %v528 = vsel %vm526, %v512, 0
        %530 = vmatprep.subr.mxu0 0.0
        %531 = vmatpush1.msra.mxu0 %v513
        %532 = vmatprep.subr.mxu0 0.0
        %533 = vmatpush1.msra.mxu0 %v514
        %534 = vmatprep.subr.mxu0 0.0
        %535 = vmatpush1.msra.mxu0 %v515
        %536 = vmatprep.subr.mxu0 0.0
        %537 = vmatpush1.msra.mxu0 %v516
        %538 = vmatprep.subr.mxu0 0.0
        %539 = vmatpush1.msra.mxu0 %v517
        %540 = vmatprep.subr.mxu0 0.0
        %541 = vmatpush1.msra.mxu0 %v518
        %542 = vmatprep.subr.mxu0 0.0
        %543 = vmatpush1.msra.mxu0 0.0
        %544 = vmatprep.subr.mxu0 0.0
        %545 = vmatpush1.msra.mxu0 0.0
        %546 = vmatprep.subr.mxu0 0.0
        %547 = vmatpush1.msra.mxu0 0.0
        %548 = vmatprep.subr.mxu0 0.0
        %549 = vmatpush1.msra.mxu0 0.0
        %550 = vmatprep.subr.mxu0 0.0
        %551 = vmatpush1.msra.mxu0 0.0
        %552 = vmatprep.subr.mxu0 0.0
        %553 = vmatpush1.msra.mxu0 0.0
        %554 = vmatprep.subr.mxu0 0.0
        %555 = vmatpush1.msra.mxu0 0.0
        %556 = vmatprep.subr.mxu0 0.0
        %557 = vmatpush1.msra.mxu0 0.0
        %558 = vmatprep.subr.mxu0 0.0
        %559 = vmatpush1.msra.mxu0 0.0
        %560 = vmatprep.subr.mxu0 0.0
        %561 = vmatpush1.msra.mxu0 0.0
        %562 = vmatprep.subr.mxu0 0.0
        %563 = vmatpush1.msra.mxu0 0.0
        %564 = vmatprep.subr.mxu0 0.0
        %565 = vmatpush1.msra.mxu0 0.0
        %566 = vmatprep.subr.mxu0 0.0
        %567 = vmatpush1.msra.mxu0 0.0
        %568 = vmatprep.subr.mxu0 0.0
        %569 = vmatpush1.msra.mxu0 0.0
        %570 = vmatprep.subr.mxu0 0.0
        %571 = vmatpush1.msra.mxu0 0.0
        %572 = vmatprep.subr.mxu0 0.0
        %573 = vmatpush1.msra.mxu0 0.0
        %574 = vmatprep.subr.mxu0 0.0
        %575 = vmatpush1.msra.mxu0 0.0
        %576 = vmatprep.subr.mxu0 0.0
        %577 = vmatpush1.msra.mxu0 0.0
        %578 = vmatprep.subr.mxu0 0.0
        %579 = vmatpush1.msra.mxu0 0.0
        %580 = vmatprep.subr.mxu0 0.0
        %581 = vmatpush1.msra.mxu0 0.0
        %582 = vmatprep.subr.mxu0 0.0
        %583 = vmatpush1.msra.mxu0 0.0
        %584 = vmatprep.subr.mxu0 0.0
        %585 = vmatpush1.msra.mxu0 0.0
        %586 = vmatprep.subr.mxu0 0.0
        %587 = vmatpush1.msra.mxu0 0.0
        %588 = vmatprep.subr.mxu0 0.0
        %589 = vmatpush1.msra.mxu0 0.0
        %590 = vmatprep.subr.mxu0 0.0
        %591 = vmatpush1.msra.mxu0 0.0
        %592 = vmatprep.subr.mxu0 0.0
        %593 = vmatpush1.msra.mxu0 0.0
        %594 = vmatprep.mubr.f32.mxu0 0.0
        %595 = vmatmul.mubr.f32.gmra.mrb[0].mxu0 %v528
        %v596 = vpop.f32.mrb[0].mxu0
        %v597 = vadd.f32 %v524, %v596
        %v598 = vpop.f32.mrb[0].mxu0
        %599 = vdwg.mxu0
        %v600 = vsel %vm431, %v597, -inf
        %601 = vmax.xlane.f32.xlu0 %v600
        %v602 = vpop.xlane.xlu0 %601
        %v603 = vsub.f32 %v597, %v602
        %v604 = vmul.f32 %v603, 1.442695
        %v605 = vpow.pop %v604
        %v606 = vsel %vm431, %v605, 0.0
        %607 = vadd.xlane.f32.xlu0 %v606
        %v608 = vpop.xlane.xlu0 %607
        %v609 = vrcp.pop %v608
        %v610 = vmul.f32 %v605, %v609
        %611 = vst.msk [vmem:[%s335] sm:$0xff] %vm431, %v610
        %612 = vst.msk [vmem:[#allocation2] sm:$0xff] %vm357, %v512
        %p613 = scmp.eq.s32.totalorder %s26, 7
        // Predicated region
        $region65: #{tpu_custom_call.1} parent=47 // pred_check
          %p614 = pneg %p613
        $region66: #{tpu_custom_call.1} parent=47 // pred_check_branch
          %616 = sbr.rel (%p614) target = $region68
        $region67: #{tpu_custom_call.1} parent=47 // pred_region
          %617 = vst.msk [vmem:[#allocation10] sm:$0xff] %vm357, %v512
        $region68: #{tpu_custom_call.1} parent=47 // pred_fallthru
          _
        %s618 = sand.u32 %s186, 1
        %s619 = scalar_lea.sflag [#allocation5], %s618
        %s620 = sand.u32 %s186, 1
        %s621 = smul.addr %s620, 8
        %s622 = scalar_lea.vmem [#allocation9], %s621
        // Predicated region
        $region69: #{tpu_custom_call.1} parent=47 // pred_check
          %p623 = pneg %p196
        $region70: #{tpu_custom_call.1} parent=47 // pred_check_branch
          %625 = sbr.rel (%p623) target = $region72
        $region71: #{tpu_custom_call.1} parent=47 // pred_region
          %s627 = ssub.s32 128, 128
          %628 = vsyncadd %s619, %s627
          %s629 = smul.addr %s26, 128
          %s630 = scalar_lea.hbm %s7, %s629
          %s632 = sshll.u32 %s622, 4
          %s633 = int_to_ptr.vmem [resolvable:$true] %s632
          %635 = dma.vmem_to_hbm [thread:$0]  %s633, 128, %s630, %s619
        $region72: #{tpu_custom_call.1} parent=47 // pred_fallthru
          _
        // Predicated region
        $region73: #{tpu_custom_call.1} parent=47 // pred_check
          %p636 = pneg %p217
        $region74: #{tpu_custom_call.1} parent=47 // pred_check_branch
          %638 = sbr.rel (%p636) target = $region76
        $region75: #{tpu_custom_call.1} parent=47 // pred_region
          %s640 = ssub.s32 128, 128
          %641 = vsyncadd [#allocation11], %s640
          %s643 = sshll.u32 [#allocation10], 4
          %s644 = int_to_ptr.vmem [resolvable:$true] %s643
          %646 = dma.vmem_to_hbm [thread:$0]  %s644, 128, %s8, [#allocation11]
        $region76: #{tpu_custom_call.1} parent=47 // pred_fallthru
          _
        // Predicated region
        $region77: #{tpu_custom_call.1} parent=47 // pred_check
          %p647 = pneg %p217
        $region78: #{tpu_custom_call.1} parent=47 // pred_check_branch
          %649 = sbr.rel (%p647) target = $region80
        $region79: #{tpu_custom_call.1} parent=47 // pred_region
          %650 = dma.done [#allocation11], 128
        $region80: #{tpu_custom_call.1} parent=47 // pred_fallthru
          _
      $region48: #{tpu_custom_call.1} parent=5 // pred_fallthru
        _
      %p651 = scmp.le.s32.totalorder 2, %s21
      // Predicated region
      $region81: #{tpu_custom_call.1} parent=5 // pred_check
        %p652 = pneg %p651
      $region82: #{tpu_custom_call.1} parent=5 // pred_check_branch
        %654 = sbr.rel (%p652) target = $region84
      $region83: #{tpu_custom_call.1} parent=5 // pred_region
        %s655 = ssub.s32 %s21, 2
        // Predicated region
        $region85: #{tpu_custom_call.1} parent=83 // pred_check
          %p656 = pneg %p202
        $region86: #{tpu_custom_call.1} parent=83 // pred_check_branch
          %658 = sbr.rel (%p656) target = $region88
        $region87: #{tpu_custom_call.1} parent=83 // pred_region
          %s659 = sand.u32 %s187, 1
          %s660 = scalar_lea.sflag [#allocation5], %s659
          %s661 = sand.u32 %s187, 1
          %s662 = smul.addr %s661, 8
          %s663 = scalar_lea.vmem [#allocation9], %s662
          %664 = dma.done %s660, 128
        $region88: #{tpu_custom_call.1} parent=83 // pred_fallthru
          _
      $region84: #{tpu_custom_call.1} parent=5 // pred_fallthru
        _
    $region6: #{tpu_custom_call.1} parent=1 // loop_footer
      %s25 = sadd.s32 1, %s21
    $region7: #{tpu_custom_call.1} parent=1 // loop_footer_branch
      %20 = sbr.rel target = $region3
    $region8: #{tpu_custom_call.1} parent=1 // loop_exit
      _
    %665 = vsyncpa [#allocation4], 1
    %s666 = scalar_lea.sflag [#allocation4], 1
    %667 = vsyncpa %s666, 1
    %668 = vsyncpa [#allocation7], 1
    %669 = vsyncpa [#allocation5], 1
    %s670 = scalar_lea.sflag [#allocation5], 1
    %671 = vsyncpa %s670, 1
    %672 = vsyncpa [#allocation11], 1

</llo_original>
